<compile_context>
chip_gen: v6e
topology: v6e:2x2x1
jax: 0.10.0
libtpu: 0.0.40
codegen_flags: <defaults>
</compile_context>

<pallas_src>
import functools

import jax
import jax.numpy as jnp
from jax.experimental import pallas as pl
from jax.experimental.pallas import tpu as pltpu


def _round_up(x, m):
    return (x + m - 1) // m * m


def _choose_tile_n(n, d, itemsize):
    """Lane-dense tile width: ~1 MiB per input tile (x2 inputs x2 buffers ~= 4 MiB
    of VMEM), comfortably under the 32 MiB default scoped limit and v7x's 64 MiB."""
    target_bytes = 1 << 20
    cap = max(128, (target_bytes // max(d * itemsize, 1)) // 128 * 128)
    cap = min(cap, 1 << 15)
    return min(cap, _round_up(n, 128))


# ---------------------------------------------------------------------------
# Fused kernel: quantile-bin weights + elementwise loss + tiled accumulation.
#   qv_ref : SMEM (2,)  f32   -- [target_quantiles[0], target_quantiles[-1]]
#   x_ref  : VMEM (D, TILE_N) -- inputs tile (native dtype)
#   y_ref  : VMEM (D, TILE_N) -- target tile (native dtype)
#   o_ref  : VMEM (1, TILE_N) -- per-shard lane partial sums (written at last step)
#   acc_ref: VMEM (1, TILE_N) f32 scratch accumulator
# ---------------------------------------------------------------------------
def _quantile_loss_kernel(qv_ref, x_ref, y_ref, o_ref, acc_ref, *,
                          quantiles, weights, loss_kind, huber_delta, use_norm):
    t = pl.program_id(1)

    @pl.when(t == 0)
    def _():
        acc_ref[...] = jnp.zeros_like(acc_ref)

    x = x_ref[...].astype(jnp.float32)          # (D, TILE_N)
    y = y_ref[...].astype(jnp.float32)          # (D, TILE_N)
    q_lo = qv_ref[0]                            # target_quantiles[0]
    q_hi = qv_ref[1]                            # target_quantiles[-1]

    if use_norm:
        # Per-sample L2 norm over the (small) D axis -> (1, TILE_N), lane-dense.
        tq = jnp.sqrt(jnp.sum(y * y, axis=0, keepdims=True))
    else:
        tq = y                                   # elementwise quantity (D, TILE_N)

    # Quantile-bin weights. Uncovered positions default to 0.0 where
    # torch.empty_like leaves them uninitialized.
    # TODO(synk): reference behavior for uncovered bins is undefined (uninitialized
    # memory); we deterministically use 0.0. Middle-bin masks compare against the
    # quantile *fractions* (self.quantiles[i]) to stay faithful to the PyTorch code.
    w = jnp.zeros_like(tq)
    w = jnp.where(tq < q_lo, jnp.float32(weights[0]), w)
    for i in range(len(quantiles) - 1):
        mask = (tq >= jnp.float32(quantiles[i])) & (tq < jnp.float32(quantiles[i + 1]))
        w = jnp.where(mask, jnp.float32(weights[i]), w)
    w = jnp.where(tq >= q_hi, jnp.float32(weights[-1]), w)

    diff = x - y
    if callable(loss_kind):
        unweighted = loss_kind(x, y)             # must be elementwise / no reduction
    elif loss_kind == "mse":
        unweighted = diff * diff
    elif loss_kind == "mae":
        unweighted = jnp.abs(diff)
    elif loss_kind == "huber":
        d = jnp.float32(huber_delta)
        ad = jnp.abs(diff)
        unweighted = jnp.where(ad < d, 0.5 * diff * diff, d * (ad - 0.5 * d))
    else:  # pragma: no cover
        raise NotImplementedError(loss_kind)

    weighted = unweighted * w                    # (D,TILE_N) * (1|D,TILE_N)
    # Per-lane partial sums; zero-padded columns contribute exactly 0.
    acc_ref[...] += jnp.sum(weighted, axis=0, keepdims=True)

    @pl.when(t == pl.num_programs(1) - 1)
    def _():
        o_ref[...] = acc_ref[...]


# ---------------------------------------------------------------------------
# Module-equivalent wrapper
# ---------------------------------------------------------------------------
class BatchQuantileLossPallas:
    def __init__(self, quantile_weights, loss_func="mse", use_norm=True,
                 huber_delta=None, tile_n=None):
        for key, value in quantile_weights.items():
            assert isinstance(key, float), "Expected quantile keys to be floats."
            assert isinstance(value, float), "Expected quantile values to be floats."
            assert 0.0 <= key <= 1.0, f"Quantile value {key} invalid."
        self.quantiles = tuple(float(k) for k in quantile_weights.keys())
        self.weights = tuple(float(v) for v in quantile_weights.values())
        self.use_norm = use_norm
        if isinstance(loss_func, str):
            if loss_func == "rmse":
                raise NotImplementedError("RMSE function has not yet been implemented.")
            if loss_func == "huber":
                assert huber_delta, "Huber loss specified but no ``huber_delta``."
            assert loss_func in ("mse", "mae", "huber")
        self.loss_kind = loss_func
        self.huber_delta = huber_delta
        if tile_n is not None:
            assert tile_n % 128 == 0, "tile_n must be a multiple of 128"
        self._tile_n_override = tile_n

    def __call__(self, inputs, target):
        inputs = jnp.asarray(inputs)   # keep native dtype; cast to f32 inside kernel
        target = jnp.asarray(target)

        # TODO(synk): for 1-D targets with use_norm=True, PyTorch broadcasts the
        # (N,) loss against (N,1) weights to an (N,N) matrix; we treat 1-D inputs
        # as (N,1) column vectors instead (the sane interpretation).
        if target.ndim == 1:
            inputs = inputs[:, None]
            target = target[:, None]
        n, d = target.shape

        # torch.quantile equivalent (sort-based; plain-JAX glue, fused by XLA).
        if self.use_norm:
            tq_flat = jnp.linalg.norm(target.astype(jnp.float32), axis=-1)
        else:
            tq_flat = target.astype(jnp.float32).ravel()
        qs = jnp.quantile(tq_flat, jnp.asarray(self.quantiles, jnp.float32))
        qvals = jnp.stack([qs[0], qs[-1]]).astype(jnp.float32)     # (2,) -> SMEM

        # Lane-dense layout: N on the 128-lane axis, zero-padded to the tile grid.
        x_t = inputs.T                                             # (D, N)
        y_t = target.T
        itemsize = jnp.dtype(target.dtype).itemsize
        tile_n = self._tile_n_override or _choose_tile_n(n, d, itemsize)
        total_tiles = pl.cdiv(n, tile_n)
        num_shards = 2 if total_tiles >= 2 else 1                  # dual-TC on v7x
        tiles_per_shard = pl.cdiv(total_tiles, num_shards)
        n_pad = num_shards * tiles_per_shard * tile_n
        if n_pad != n:
            x_t = jnp.pad(x_t, ((0, 0), (0, n_pad - n)))
            y_t = jnp.pad(y_t, ((0, 0), (0, n_pad - n)))

        kernel = functools.partial(
            _quantile_loss_kernel,
            quantiles=self.quantiles, weights=self.weights,
            loss_kind=self.loss_kind, huber_delta=self.huber_delta,
            use_norm=self.use_norm)

        row_map = lambda s, t: (0, s * tiles_per_shard + t)        # noqa: E731

        out = pl.pallas_call(
            kernel,
            out_shape=jax.ShapeDtypeStruct((1, num_shards * tile_n), jnp.float32),
            grid=(num_shards, tiles_per_shard),
            in_specs=[
                pl.BlockSpec(memory_space=pltpu.MemorySpace.SMEM),  # qvals
                pl.BlockSpec((d, tile_n), row_map),                 # inputs (D, N)
                pl.BlockSpec((d, tile_n), row_map),                 # target (D, N)
            ],
            out_specs=pl.BlockSpec((1, tile_n), lambda s, t: (0, s)),
            scratch_shapes=[pltpu.VMEM((1, tile_n), jnp.float32)],
            compiler_params=pltpu.CompilerParams(
                dimension_semantics=("parallel", "arbitrary")),
        )(qvals, x_t, y_t)

        # Final mean over the *true* element count (padding contributed zeros).
        return jnp.sum(out) / jnp.float32(n * d)


# ---------------------------------------------------------------------------
# Pure-JAX reference (same zero-default convention for uncovered bins,
# same (N,1) convention for 1-D targets)
# ---------------------------------------------------------------------------
def _reference(inputs, target, quantile_weights, loss_kind, use_norm, huber_delta):
    inputs = jnp.asarray(inputs, jnp.float32)
    target = jnp.asarray(target, jnp.float32)
    if target.ndim == 1:
        inputs, target = inputs[:, None], target[:, None]
    quantiles = jnp.asarray(list(quantile_weights.keys()), jnp.float32)
    weights = jnp.asarray(list(quantile_weights.values()), jnp.float32)
    if use_norm:
        tq = jnp.linalg.norm(target, axis=-1, keepdims=True)
    else:
        tq = target
    target_quantiles = jnp.quantile(tq.ravel(), quantiles)
    w = jnp.zeros_like(tq)
    w = jnp.where(tq < target_quantiles[0], weights[0], w)
    for i in range(len(weights) - 1):
        mask = (tq >= quantiles[i]) & (tq < quantiles[i + 1])
        w = jnp.where(mask, weights[i], w)
    w = jnp.where(tq >= target_quantiles[-1], weights[-1], w)
    diff = inputs - target
    if loss_kind == "mse":
        ul = diff * diff
    elif loss_kind == "mae":
        ul = jnp.abs(diff)
    else:
        ad = jnp.abs(diff)
        ul = jnp.where(ad < huber_delta, 0.5 * diff * diff,
                       huber_delta * (ad - 0.5 * huber_delta))
    return jnp.mean(ul * w)


if __name__ == "__main__":
    key = jax.random.PRNGKey(0)
    quantile_weights = {0.1: 0.5, 0.5: 1.0, 0.9: 2.0}

    # Case 1: 1000 atoms x 3-component force vectors, huber + norm.
    # tile_n=256 forces a 2-shard x 2-tile grid (exercises padding, the
    # "parallel" shard axis and the accumulator reduction).
    k1, k2 = jax.random.split(key)
    target1 = jax.random.normal(k1, (1000, 3), jnp.float32)
    inputs1 = target1 + 0.1 * jax.random.normal(k2, (1000, 3), jnp.float32)
    loss1 = BatchQuantileLossPallas(quantile_weights, loss_func="huber",
                                    use_norm=True, huber_delta=0.5, tile_n=256)
    out1 = jax.block_until_ready(loss1(inputs1, target1))
    ref1 = _reference(inputs1, target1, quantile_weights, "huber", True, 0.5)
    assert jnp.allclose(out1, ref1, rtol=1e-4, atol=1e-6), (float(out1), float(ref1))

    # Case 2: elementwise quantity (use_norm=False), mse, single-tile path.
    k3, k4 = jax.random.split(k2)
    target2 = jax.random.normal(k3, (300, 5), jnp.float32)
    inputs2 = target2 + 0.05 * jax.random.normal(k4, (300, 5), jnp.float32)
    loss2 = BatchQuantileLossPallas(quantile_weights, loss_func="mse",
                                    use_norm=False)
    out2 = jax.block_until_ready(loss2(inputs2, target2))
    ref2 = _reference(inputs2, target2, quantile_weights, "mse", False, None)
    assert jnp.allclose(out2, ref2, rtol=1e-4, atol=1e-6), (float(out2), float(ref2))

    print("KERNEL_OK")
</pallas_src>

<mosaic_0001>
module attributes {stable_mosaic.version = 11 : i64} {
  func.func @_quantile_loss_kernel(%arg0: i32, %arg1: i32, %arg2: memref<2xf32, #tpu.memory_space<smem>>, %arg3: memref<3x256xf32, #tpu.memory_space<vmem>>, %arg4: memref<3x256xf32, #tpu.memory_space<vmem>>, %arg5: memref<1x256xf32, #tpu.memory_space<vmem>>, %arg6: memref<1x256xf32, #tpu.memory_space<vmem>>) attributes {dimension_semantics = [#tpu.dimension_semantics<parallel>, #tpu.dimension_semantics<arbitrary>], iteration_bounds = array<i64: 2, 2>, scalar_prefetch = 0 : i64, scratch_operands = 1 : i64, tpu.core_type = #tpu.core_type<tc>, window_params = [{transform_indices = @transform_0, window_bounds = array<i64: 2>}, {transform_indices = @transform_1, window_bounds = array<i64: 3, 256>}, {transform_indices = @transform_2, window_bounds = array<i64: 3, 256>}, {transform_indices = @transform_3, window_bounds = array<i64: 1, 256>}]} {
    %c0_i32 = arith.constant 0 : i32
    %0 = arith.cmpi eq, %arg1, %c0_i32 : i32
    %1 = arith.extui %0 : i1 to i32
    %c0_i32_0 = arith.constant 0 : i32
    %2 = arith.cmpi ne, %1, %c0_i32_0 : i32
    scf.if %2 {
      %cst_25 = arith.constant 0.000000e+00 : f32
      %57 = vector.broadcast %cst_25 : f32 to vector<1x256xf32>
      %c0_26 = arith.constant 0 : index
      %c0_27 = arith.constant 0 : index
      %58 = vector.load %arg6[%c0_26, %c0_27] : memref<1x256xf32, #tpu.memory_space<vmem>>, vector<1x256xf32>
      tpu.vector_store %arg6[%c0_26, %c0_27], %57 {strides = array<i32>} : memref<1x256xf32, #tpu.memory_space<vmem>>, vector<1x256xf32>,
    } else {
    }
    %c0 = arith.constant 0 : index
    %c0_1 = arith.constant 0 : index
    %3 = vector.load %arg3[%c0, %c0_1] : memref<3x256xf32, #tpu.memory_space<vmem>>, vector<3x256xf32>
    %c0_2 = arith.constant 0 : index
    %c0_3 = arith.constant 0 : index
    %4 = vector.load %arg4[%c0_2, %c0_3] : memref<3x256xf32, #tpu.memory_space<vmem>>, vector<3x256xf32>
    %c0_4 = arith.constant 0 : index
    %5 = memref.load %arg2[%c0_4] : memref<2xf32, #tpu.memory_space<smem>>
    %c1 = arith.constant 1 : index
    %6 = memref.load %arg2[%c1] : memref<2xf32, #tpu.memory_space<smem>>
    %7 = arith.mulf %4, %4 : vector<3x256xf32>
    %cst = arith.constant dense<0.000000e+00> : vector<256xf32>
    %8 = vector.multi_reduction <add>, %7, %cst [0] : vector<3x256xf32> to vector<256xf32>
    %9 = vector.shape_cast %8 : vector<256xf32> to vector<1x256xf32>
    %10 = math.sqrt %9 : vector<1x256xf32>
    %cst_5 = arith.constant 0.000000e+00 : f32
    %11 = vector.broadcast %cst_5 : f32 to vector<1x256xf32>
    %12 = vector.broadcast %5 : f32 to vector<1x256xf32>
    %13 = arith.cmpf olt, %10, %12 : vector<1x256xf32>
    %cst_6 = arith.constant 5.000000e-01 : f32
    %14 = vector.broadcast %cst_6 : f32 to vector<1x256xf32>
    %15 = arith.select %13, %14, %11 : vector<1x256xi1>, vector<1x256xf32>
    %cst_7 = arith.constant 1.000000e-01 : f32
    %16 = vector.broadcast %cst_7 : f32 to vector<1x256xf32>
    %17 = arith.cmpf oge, %10, %16 : vector<1x256xf32>
    %cst_8 = arith.constant 5.000000e-01 : f32
    %18 = vector.broadcast %cst_8 : f32 to vector<1x256xf32>
    %19 = arith.cmpf olt, %10, %18 : vector<1x256xf32>
    %20 = arith.andi %17, %19 : vector<1x256xi1>
    %cst_9 = arith.constant 5.000000e-01 : f32
    %21 = vector.broadcast %cst_9 : f32 to vector<1x256xf32>
    %22 = arith.select %20, %21, %15 : vector<1x256xi1>, vector<1x256xf32>
    %cst_10 = arith.constant 5.000000e-01 : f32
    %23 = vector.broadcast %cst_10 : f32 to vector<1x256xf32>
    %24 = arith.cmpf oge, %10, %23 : vector<1x256xf32>
    %cst_11 = arith.constant 0.899999976 : f32
    %25 = vector.broadcast %cst_11 : f32 to vector<1x256xf32>
    %26 = arith.cmpf olt, %10, %25 : vector<1x256xf32>
    %27 = arith.andi %24, %26 : vector<1x256xi1>
    %cst_12 = arith.constant 1.000000e+00 : f32
    %28 = vector.broadcast %cst_12 : f32 to vector<1x256xf32>
    %29 = arith.select %27, %28, %22 : vector<1x256xi1>, vector<1x256xf32>
    %30 = vector.broadcast %6 : f32 to vector<1x256xf32>
    %31 = arith.cmpf oge, %10, %30 : vector<1x256xf32>
    %cst_13 = arith.constant 2.000000e+00 : f32
    %32 = vector.broadcast %cst_13 : f32 to vector<1x256xf32>
    %33 = arith.select %31, %32, %29 : vector<1x256xi1>, vector<1x256xf32>
    %34 = arith.subf %3, %4 : vector<3x256xf32>
    %35 = math.absf %34 : vector<3x256xf32>
    %cst_14 = arith.constant 5.000000e-01 : f32
    %36 = vector.broadcast %cst_14 : f32 to vector<3x256xf32>
    %37 = arith.cmpf olt, %35, %36 : vector<3x256xf32>
    %cst_15 = arith.constant 5.000000e-01 : f32
    %38 = vector.broadcast %cst_15 : f32 to vector<3x256xf32>
    %39 = arith.mulf %38, %34 : vector<3x256xf32>
    %40 = arith.mulf %39, %34 : vector<3x256xf32>
    %cst_16 = arith.constant 5.000000e-01 : f32
    %cst_17 = arith.constant 5.000000e-01 : f32
    %41 = arith.mulf %cst_16, %cst_17 : f32
    %42 = vector.broadcast %41 : f32 to vector<3x256xf32>
    %43 = arith.subf %35, %42 : vector<3x256xf32>
    %cst_18 = arith.constant 5.000000e-01 : f32
    %44 = vector.broadcast %cst_18 : f32 to vector<3x256xf32>
    %45 = arith.mulf %44, %43 : vector<3x256xf32>
    %46 = arith.select %37, %40, %45 : vector<3x256xi1>, vector<3x256xf32>
    %47 = vector.broadcast %33 : vector<1x256xf32> to vector<3x256xf32>
    %48 = arith.mulf %46, %47 : vector<3x256xf32>
    %c0_19 = arith.constant 0 : index
    %c0_20 = arith.constant 0 : index
    %49 = vector.load %arg6[%c0_19, %c0_20] : memref<1x256xf32, #tpu.memory_space<vmem>>, vector<1x256xf32>
    %cst_21 = arith.constant dense<0.000000e+00> : vector<256xf32>
    %50 = vector.multi_reduction <add>, %48, %cst_21 [0] : vector<3x256xf32> to vector<256xf32>
    %51 = vector.shape_cast %50 : vector<256xf32> to vector<1x256xf32>
    %52 = arith.addf %49, %51 : vector<1x256xf32>
    %c0_22 = arith.constant 0 : index
    %c0_23 = arith.constant 0 : index
    %53 = vector.load %arg6[%c0_22, %c0_23] : memref<1x256xf32, #tpu.memory_space<vmem>>, vector<1x256xf32>
    tpu.vector_store %arg6[%c0_22, %c0_23], %52 {strides = array<i32>} : memref<1x256xf32, #tpu.memory_space<vmem>>, vector<1x256xf32>,
    %c1_i32 = arith.constant 1 : i32
    %54 = arith.cmpi eq, %arg1, %c1_i32 : i32
    %55 = arith.extui %54 : i1 to i32
    %c0_i32_24 = arith.constant 0 : i32
    %56 = arith.cmpi ne, %55, %c0_i32_24 : i32
    scf.if %56 {
      %c0_25 = arith.constant 0 : index
      %c0_26 = arith.constant 0 : index
      %57 = vector.load %arg6[%c0_25, %c0_26] : memref<1x256xf32, #tpu.memory_space<vmem>>, vector<1x256xf32>
      %c0_27 = arith.constant 0 : index
      %c0_28 = arith.constant 0 : index
      %58 = vector.load %arg5[%c0_27, %c0_28] : memref<1x256xf32, #tpu.memory_space<vmem>>, vector<1x256xf32>
      tpu.vector_store %arg5[%c0_27, %c0_28], %57 {strides = array<i32>} : memref<1x256xf32, #tpu.memory_space<vmem>>, vector<1x256xf32>,
    } else {
    }
    return
  }
  func.func @transform_0(%arg0: i32, %arg1: i32) -> i32 {
    %c0_i32 = arith.constant 0 : i32
    %c0_i32_0 = arith.constant 0 : i32
    return %c0_i32 : i32
  }
  func.func @transform_1(%arg0: i32, %arg1: i32) -> (i32, i32) {
    %c2_i32 = arith.constant 2 : i32
    %0 = arith.muli %arg0, %c2_i32 : i32
    %1 = arith.addi %0, %arg1 : i32
    %c0_i32 = arith.constant 0 : i32
    %c0_i32_0 = arith.constant 0 : i32
    return %c0_i32, %1 : i32, i32
  }
  func.func @transform_2(%arg0: i32, %arg1: i32) -> (i32, i32) {
    %c2_i32 = arith.constant 2 : i32
    %0 = arith.muli %arg0, %c2_i32 : i32
    %1 = arith.addi %0, %arg1 : i32
    %c0_i32 = arith.constant 0 : i32
    %c0_i32_0 = arith.constant 0 : i32
    return %c0_i32, %1 : i32, i32
  }
  func.func @transform_3(%arg0: i32, %arg1: i32) -> (i32, i32) {
    %c0_i32 = arith.constant 0 : i32
    %c0_i32_0 = arith.constant 0 : i32
    return %c0_i32, %arg0 : i32, i32
  }
}

</mosaic_0001>

<llo_original>
// kernel: tpu_custom_call.1
$region0: #{tpu_custom_call.1}
  #allocation0 [shape = 'u32[]', space=smem, size = 0x4, offset = 0x4, fixed_abs, tag = 'smem constant byte address 0x4 - core index']
  #allocation1 [shape = 'u32[144,128]{1,0:T(1,128)}', space=vmem, size = 0x12000, scoped, tag = 'internal scratch']
  #allocation2 [shape = 'f32[1,256]{1,0:T(1,128)}', space=vmem, size = 0x400, scoped, tag = 'scratch operand']
  %s0 = inlined_call_operand.hbm [shape: f32[2], index: 0, kind: input, shape index: {}]
  %s1 = inlined_call_operand.hbm [shape: f32[3,1024], index: 1, kind: input, shape index: {}]
  %s2 = inlined_call_operand.hbm [shape: f32[3,1024], index: 2, kind: input, shape index: {}]
  %s3 = inlined_call_operand.hbm [shape: f32[1,512], index: 3, kind: output, shape index: {}]
  %s4 = sld [smem:[#allocation0]]
  $region65: #{tpu_custom_call.1} parent=0
    _
  %s6 = ssub.s32 1, %s4
  %s7 = scalar_select 0, %s6, %s4
  $region1: #{tpu_custom_call.1} parent=0
    #allocation3 [shape = 'u8[512]{0}', space=smem, size = 0x200, scoped, tag = 'input window, operand 0, single buffered']
    #allocation4 [shape = 's32[2]{0}', space=sflag, size = 0x8, scoped, tag = 'scoped memory for tpu_custom_call.1']
    #allocation5 [shape = 's32[2]{0}', space=sflag, size = 0x8, scoped, tag = 'scoped memory for tpu_custom_call.1']
    #allocation6 [shape = 's32[2]{0}', space=sflag, size = 0x8, scoped, tag = 'scoped memory for tpu_custom_call.1']
    #allocation7 [shape = 'u8[8192]{0}', space=vmem, size = 0x2000, scoped, tag = 'input window, operand 1']
    #allocation8 [shape = 'u8[8192]{0}', space=vmem, size = 0x2000, scoped, tag = 'input window, operand 2']
    #allocation9 [shape = 's32[2]{0}', space=sflag, size = 0x8, scoped, tag = 'scoped memory for tpu_custom_call.1']
    #allocation10 [shape = 'u8[2048]{0}', space=vmem, size = 0x800, scoped, tag = 'output window, operand 0']
    %8 = vsyncpa [#allocation6], 0
    %9 = vsyncpa [#allocation4], 0
    %s10 = scalar_lea.sflag [#allocation4], 1
    %11 = vsyncpa %s10, 0
    %12 = vsyncpa [#allocation9], 0
    %s13 = scalar_lea.sflag [#allocation9], 1
    %14 = vsyncpa %s13, 0
    %15 = vsyncpa [#allocation5], 0
    %s16 = scalar_lea.sflag [#allocation5], 1
    %17 = vsyncpa %s16, 0
    loop: start=0, step=1, limit=6
    $region2: #{tpu_custom_call.1} parent=1 // loop_pre_header
      _
    $region3: #{tpu_custom_call.1} parent=1 // loop_header
      %s19 = sphi 0, %s23
      %p20 = scmp.ge.s32.totalorder %s19, 6
      %s26 = sphi 0, %s38
      %s27 = sphi 0, %s34
      %s28 = sphi 0, %s26
      %s29 = sphi 0, %s27
      %s30 = sphi 0, %s28
      %s31 = sphi 0, %s29
      %s39 = sphi 0, %s39
      %s41 = sphi 0, %s39
      %s42 = sphi 0, %s41
      %s56 = sphi 0, %s42
      %s66 = sphi 0, %s68
      %s69 = sphi 0, %s66
      %s70 = sphi 0, %s69
      %s86 = sphi 0, %s70
      %s96 = sphi 0, %s98
      %s99 = sphi 0, %s96
      %s100 = sphi 0, %s99
      %s116 = sphi 0, %s100
      %s122 = sphi 0, %s124
      %s125 = sphi 0, %s122
      %s126 = sphi 0, %s125
      %s142 = sphi 0, %s126
    $region4: #{tpu_custom_call.1} parent=1 // loop_header_branch
      %22 = sbr.rel (%p20) target = $region8
    $region5: #{tpu_custom_call.1} parent=1 // loop_body
      %s24 = ssub.s32 %s19, 1
      %s25 = ssub.s32 %s19, 2
      %s32 = sadd.s32 1, %s27
      %p33 = scmp.ge.s32.totalorder %s32, 2
      %s34 = scalar_select %p33, 0, %s32
      %s35 = sadd.s32 1, %s26
      %s36 = scalar_select %p33, %s35, %s26
      %p37 = scmp.ge.s32.totalorder %s36, 2
      %s38 = scalar_select %p37, 0, %s36
      %s40 = sadd.s32 %s39, 1
      %p43 = scmp.eq.s32.totalorder %s19, 3
      %p44 = scmp.ne.s32.totalorder %s39, %s41
      %p45 = scmp.eq.s32.totalorder %s19, 0
      %p46 = por %p44, %p45
      %p47 = scmp.ne.s32.totalorder %s39, %s41
      %p48 = scmp.eq.s32.totalorder %s24, 3
      %p49 = por %p47, %p48
      %p50 = scmp.ne.s32.totalorder %s41, %s42
      %p51 = scmp.eq.s32.totalorder %s24, 0
      %p52 = por %p50, %p51
      %p53 = scmp.ne.s32.totalorder %s41, %s42
      %p54 = scmp.eq.s32.totalorder %s25, 3
      %p55 = por %p53, %p54
      %p57 = scmp.ne.s32.totalorder %s42, %s56
      %p58 = scmp.eq.s32.totalorder %s25, 0
      %p59 = por %p57, %p58
      %s60 = smul.u32 %s26, 2
      %s61 = sadd.s32 %s60, %s27
      %s62 = smul.u32 %s38, 2
      %s63 = sadd.s32 %s62, %s34
      %s64 = ssub.s32 %s61, %s63
      %p65 = scmp.eq.s32.totalorder %s64, 0
      %s67 = sadd.s32 %s66, 1
      %s68 = scalar_select %p65, %s66, %s67
      %p71 = pneg %p65
      %p72 = scmp.eq.s32.totalorder %s19, 3
      %p73 = por %p71, %p72
      %p74 = scmp.ne.s32.totalorder %s66, %s69
      %p75 = scmp.eq.s32.totalorder %s19, 0
      %p76 = por %p74, %p75
      %p77 = scmp.ne.s32.totalorder %s66, %s69
      %p78 = scmp.eq.s32.totalorder %s24, 3
      %p79 = por %p77, %p78
      %p80 = scmp.ne.s32.totalorder %s69, %s70
      %p81 = scmp.eq.s32.totalorder %s24, 0
      %p82 = por %p80, %p81
      %p83 = scmp.ne.s32.totalorder %s69, %s70
      %p84 = scmp.eq.s32.totalorder %s25, 3
      %p85 = por %p83, %p84
      %p87 = scmp.ne.s32.totalorder %s70, %s86
      %p88 = scmp.eq.s32.totalorder %s25, 0
      %p89 = por %p87, %p88
      %s90 = smul.u32 %s26, 2
      %s91 = sadd.s32 %s90, %s27
      %s92 = smul.u32 %s38, 2
      %s93 = sadd.s32 %s92, %s34
      %s94 = ssub.s32 %s91, %s93
      %p95 = scmp.eq.s32.totalorder %s94, 0
      %s97 = sadd.s32 %s96, 1
      %s98 = scalar_select %p95, %s96, %s97
      %p101 = pneg %p95
      %p102 = scmp.eq.s32.totalorder %s19, 3
      %p103 = por %p101, %p102
      %p104 = scmp.ne.s32.totalorder %s96, %s99
      %p105 = scmp.eq.s32.totalorder %s19, 0
      %p106 = por %p104, %p105
      %p107 = scmp.ne.s32.totalorder %s96, %s99
      %p108 = scmp.eq.s32.totalorder %s24, 3
      %p109 = por %p107, %p108
      %p110 = scmp.ne.s32.totalorder %s99, %s100
      %p111 = scmp.eq.s32.totalorder %s24, 0
      %p112 = por %p110, %p111
      %p113 = scmp.ne.s32.totalorder %s99, %s100
      %p114 = scmp.eq.s32.totalorder %s25, 3
      %p115 = por %p113, %p114
      %p117 = scmp.ne.s32.totalorder %s100, %s116
      %p118 = scmp.eq.s32.totalorder %s25, 0
      %p119 = por %p117, %p118
      %s120 = ssub.s32 %s26, %s38
      %p121 = scmp.eq.s32.totalorder %s120, 0
      %s123 = sadd.s32 %s122, 1
      %s124 = scalar_select %p121, %s122, %s123
      %p127 = pneg %p121
      %p128 = scmp.eq.s32.totalorder %s19, 3
      %p129 = por %p127, %p128
      %p130 = scmp.ne.s32.totalorder %s122, %s125
      %p131 = scmp.eq.s32.totalorder %s19, 0
      %p132 = por %p130, %p131
      %p133 = scmp.ne.s32.totalorder %s122, %s125
      %p134 = scmp.eq.s32.totalorder %s24, 3
      %p135 = por %p133, %p134
      %p136 = scmp.ne.s32.totalorder %s125, %s126
      %p137 = scmp.eq.s32.totalorder %s24, 0
      %p138 = por %p136, %p137
      %p139 = scmp.ne.s32.totalorder %s125, %s126
      %p140 = scmp.eq.s32.totalorder %s25, 3
      %p141 = por %p139, %p140
      %p143 = scmp.ne.s32.totalorder %s126, %s142
      %p144 = scmp.eq.s32.totalorder %s25, 0
      %p145 = por %p143, %p144
      %p146 = scmp.le.s32.totalorder 1, %s19
      %p147 = scmp.lt.s32.totalorder %s19, 5
      %p148 = pnand %p146, %p147
      %p149 = pneg %p148
      // Predicated region
      $region9: #{tpu_custom_call.1} parent=5 // pred_check
        _
      $region10: #{tpu_custom_call.1} parent=5 // pred_check_branch
        %151 = sbr.rel (%p148) target = $region12
      $region11: #{tpu_custom_call.1} parent=5 // pred_region
        %s152 = ssub.s32 %s19, 1
        // Predicated region
        $region13: #{tpu_custom_call.1} parent=11 // pred_check
          %p153 = pneg %p52
        $region14: #{tpu_custom_call.1} parent=11 // pred_check_branch
          %155 = sbr.rel (%p153) target = $region16
        $region15: #{tpu_custom_call.1} parent=11 // pred_region
          %s157 = ssub.s32 16, 16
          %158 = vsyncadd [#allocation6], %s157
          %161 = dma.hbm_to_smem %s0, 16, [#allocation3], [#allocation6]
        $region16: #{tpu_custom_call.1} parent=11 // pred_fallthru
          _
      $region12: #{tpu_custom_call.1} parent=5 // pred_fallthru
        _
      %p162 = scmp.lt.s32.totalorder %s19, 4
      // Predicated region
      $region17: #{tpu_custom_call.1} parent=5 // pred_check
        %p163 = pneg %p162
      $region18: #{tpu_custom_call.1} parent=5 // pred_check_branch
        %165 = sbr.rel (%p163) target = $region20
      $region19: #{tpu_custom_call.1} parent=5 // pred_region
        // Predicated region
        $region21: #{tpu_custom_call.1} parent=19 // pred_check
          %p166 = pneg %p76
        $region22: #{tpu_custom_call.1} parent=19 // pred_check_branch
          %168 = sbr.rel (%p166) target = $region24
        $region23: #{tpu_custom_call.1} parent=19 // pred_region
          %s169 = sand.u32 %s66, 1
          %s170 = scalar_lea.sflag [#allocation4], %s169
          %s171 = sand.u32 %s66, 1
          %s172 = smul.addr %s171, 8
          %s173 = scalar_lea.vmem [#allocation7], %s172
          %s174 = smul.u32 %s26, 2
          %s175 = sadd.s32 %s174, %s27
          %s176 = smul.u32 2, %s175
          %s178 = ssub.s32 128, 128
          %179 = vsyncadd %s170, %s178
          %s180 = smul.addr %s176, 64
          %s181 = scalar_lea.hbm %s1, %s180
          %s183 = sshll.u32 %s173, 4
          %s184 = int_to_ptr.vmem [resolvable:$true] %s183
          %186 = dma.hbm_to_vmem [thread:$0]  %s181, 128, %s184, %s170
        $region24: #{tpu_custom_call.1} parent=19 // pred_fallthru
          _
        // Predicated region
        $region25: #{tpu_custom_call.1} parent=19 // pred_check
          %p187 = pneg %p106
        $region26: #{tpu_custom_call.1} parent=19 // pred_check_branch
          %189 = sbr.rel (%p187) target = $region28
        $region27: #{tpu_custom_call.1} parent=19 // pred_region
          %s190 = sand.u32 %s96, 1
          %s191 = scalar_lea.sflag [#allocation9], %s190
          %s192 = sand.u32 %s96, 1
          %s193 = smul.addr %s192, 8
          %s194 = scalar_lea.vmem [#allocation8], %s193
          %s195 = smul.u32 %s26, 2
          %s196 = sadd.s32 %s195, %s27
          %s197 = smul.u32 2, %s196
          %s199 = ssub.s32 128, 128
          %200 = vsyncadd %s191, %s199
          %s201 = smul.addr %s197, 64
          %s202 = scalar_lea.hbm %s2, %s201
          %s204 = sshll.u32 %s194, 4
          %s205 = int_to_ptr.vmem [resolvable:$true] %s204
          %207 = dma.hbm_to_vmem [thread:$0]  %s202, 128, %s205, %s191
        $region28: #{tpu_custom_call.1} parent=19 // pred_fallthru
          _
      $region20: #{tpu_custom_call.1} parent=5 // pred_fallthru
        _
      %p208 = scmp.le.s32.totalorder 1, %s19
      %p209 = scmp.lt.s32.totalorder %s19, 5
      %p210 = pnand %p208, %p209
      %p211 = pneg %p210
      // Predicated region
      $region29: #{tpu_custom_call.1} parent=5 // pred_check
        _
      $region30: #{tpu_custom_call.1} parent=5 // pred_check_branch
        %213 = sbr.rel (%p210) target = $region32
      $region31: #{tpu_custom_call.1} parent=5 // pred_region
        %s214 = ssub.s32 %s19, 1
        // Predicated region
        $region33: #{tpu_custom_call.1} parent=31 // pred_check
          %p215 = pneg %p52
        $region34: #{tpu_custom_call.1} parent=31 // pred_check_branch
          %217 = sbr.rel (%p215) target = $region36
        $region35: #{tpu_custom_call.1} parent=31 // pred_region
          %218 = dma.done [#allocation6], 16
        $region36: #{tpu_custom_call.1} parent=31 // pred_fallthru
          _
        %s219 = sand.u32 %s69, 1
        %s220 = scalar_lea.sflag [#allocation4], %s219
        %s221 = sand.u32 %s69, 1
        %s222 = smul.addr %s221, 8
        %s223 = scalar_lea.vmem [#allocation7], %s222
        // Predicated region
        $region37: #{tpu_custom_call.1} parent=31 // pred_check
          %p224 = pneg %p82
        $region38: #{tpu_custom_call.1} parent=31 // pred_check_branch
          %226 = sbr.rel (%p224) target = $region40
        $region39: #{tpu_custom_call.1} parent=31 // pred_region
          %227 = dma.done %s220, 128
        $region40: #{tpu_custom_call.1} parent=31 // pred_fallthru
          _
        %s228 = sand.u32 %s99, 1
        %s229 = scalar_lea.sflag [#allocation9], %s228
        %s230 = sand.u32 %s99, 1
        %s231 = smul.addr %s230, 8
        %s232 = scalar_lea.vmem [#allocation8], %s231
        // Predicated region
        $region41: #{tpu_custom_call.1} parent=31 // pred_check
          %p233 = pneg %p112
        $region42: #{tpu_custom_call.1} parent=31 // pred_check_branch
          %235 = sbr.rel (%p233) target = $region44
        $region43: #{tpu_custom_call.1} parent=31 // pred_region
          %236 = dma.done %s229, 128
        $region44: #{tpu_custom_call.1} parent=31 // pred_fallthru
          _
        %237 = sfence
        %p238 = pneg %p52
        %p239 = pneg %p49
        %s240 = sand.u32 %s69, 1
        %s241 = scalar_lea.sflag [#allocation4], %s240
        %s242 = sand.u32 %s69, 1
        %s243 = smul.addr %s242, 8
        %s244 = scalar_lea.vmem [#allocation7], %s243
        %p245 = pneg %p82
        %p246 = pneg %p79
        %s247 = sand.u32 %s99, 1
        %s248 = scalar_lea.sflag [#allocation9], %s247
        %s249 = sand.u32 %s99, 1
        %s250 = smul.addr %s249, 8
        %s251 = scalar_lea.vmem [#allocation8], %s250
        %p252 = pneg %p112
        %p253 = pneg %p109
        %p254 = pneg %p138
        %p255 = pneg %p135
        %s256 = sand.u32 %s125, 1
        %s257 = scalar_lea.sflag [#allocation5], %s256
        %s258 = sand.u32 %s125, 1
        %s259 = smul.addr %s258, 2
        %s260 = scalar_lea.vmem [#allocation10], %s259
        %s261 = smul.u32 %s28, 2
        %s262 = sadd.s32 %s261, %s29
        %s263 = smul.u32 2, %s262
        %s264 = smul.u32 %s28, 2
        %s265 = sadd.s32 %s264, %s29
        %s266 = smul.u32 2, %s265
        %s267 = smul.u32 2, %s28
        %p268 = scmp.eq.s32.totalorder %s29, 0
        // Predicated region
        $region45: #{tpu_custom_call.1} parent=31 // pred_check
          %p269 = pneg %p268
        $region46: #{tpu_custom_call.1} parent=31 // pred_check_branch
          %271 = sbr.rel (%p269) target = $region48
        $region47: #{tpu_custom_call.1} parent=31 // pred_region
          %v272 = vlaneseq
          %vm273 = vcmp.ge.s32.totalorder %v272, 0
          %vm274 = vcmp.lt.s32.totalorder %v272, 256
          %vm275 = vmand %vm273, %vm274
          %276 = vst.msk [vmem:[#allocation2] sm:$0x3] %vm275, 0.0
        $region48: #{tpu_custom_call.1} parent=31 // pred_fallthru
          _
        %v277 = vld [vmem:[%s223] sm:$0x77]
        %v278 = vld [vmem:[%s232] sm:$0x77]
        %s279 = sld [smem:[#allocation3]]
        %s280 = sld [smem:[#allocation3 + $0x1]]
        %v281 = vmul.f32 %v278, %v278
        %v283 = vcombine.high %v281, %v281
        %vm285 = vcmask 1042432
        %v286 = vsel %vm285, %v281, 0.0
        %v287 = vrot.slane %v286, 4
        %v288 = vadd.f32 %v286, %v287
        %v289 = vrot.slane %v288, 2
        %v290 = vadd.f32 %v288, %v289
        %v291 = vrot.slane %v290, 1
        %v292 = vadd.f32 %v290, %v291
        %v293 = vsel %vm285, %v283, 0.0
        %v294 = vrot.slane %v293, 4
        %v295 = vadd.f32 %v293, %v294
        %v296 = vrot.slane %v295, 2
        %v297 = vadd.f32 %v295, %v296
        %v298 = vrot.slane %v297, 1
        %v299 = vadd.f32 %v297, %v298
        %v300 = vrsqrt.pop %v292
        %v301 = vmul.f32 %v292, %v300
        %vm302 = vcmp.eq.f32.partialorder %v292, inf
        %v303 = vsel %vm302, %v292, %v301
        %vm304 = vcmp.eq.f32.partialorder %v292, 0.0
        %v305 = vand.u32 %v292, 2147483648
        %v306 = vsel %vm304, %v305, %v303
        %v307 = vrsqrt.pop %v299
        %v308 = vmul.f32 %v299, %v307
        %vm309 = vcmp.eq.f32.partialorder %v299, inf
        %v310 = vsel %vm309, %v299, %v308
        %vm311 = vcmp.eq.f32.partialorder %v299, 0.0
        %v312 = vand.u32 %v299, 2147483648
        %v313 = vsel %vm311, %v312, %v310
        %v314 = vstv %s279
        %vm315 = vcmp.lt.f32.partialorder %v306, %v314
        %vm316 = vcmp.lt.f32.partialorder %v313, %v314
        %v317 = vsel %vm315, 0.5, 0.0
        %v318 = vsel %vm316, 0.5, 0.0
        %vm319 = vcmp.ge.f32.partialorder %v306, 0.1
        %vm320 = vcmp.ge.f32.partialorder %v313, 0.1
        %vm321 = vcmp.lt.f32.partialorder %v306, 0.5
        %vm322 = vcmp.lt.f32.partialorder %v313, 0.5
        %vm323 = vmand %vm319, %vm321
        %vm324 = vmand %vm320, %vm322
        %v325 = vsel %vm323, 0.5, %v317
        %v326 = vsel %vm324, 0.5, %v318
        %vm327 = vcmp.ge.f32.partialorder %v306, 0.5
        %vm328 = vcmp.ge.f32.partialorder %v313, 0.5
        %vm329 = vcmp.lt.f32.partialorder %v306, 0.9
        %vm330 = vcmp.lt.f32.partialorder %v313, 0.9
        %vm331 = vmand %vm327, %vm329
        %vm332 = vmand %vm328, %vm330
        %v333 = vsel %vm331, 1.0, %v325
        %v334 = vsel %vm332, 1.0, %v326
        %v335 = vstv %s280
        %vm336 = vcmp.ge.f32.partialorder %v306, %v335
        %vm337 = vcmp.ge.f32.partialorder %v313, %v335
        %v338 = vsel %vm336, 2.0, %v333
        %v339 = vsel %vm337, 2.0, %v334
        %v340 = vsub.f32 %v277, %v278
        %v341 = vand.u32 2147483647, %v340
        %vm342 = vcmp.lt.f32.partialorder %v341, 0.5
        %v343 = vmul.f32 %v340, 0.5
        %v344 = vmul.f32 %v343, %v340
        %v345 = vsub.f32 %v341, 0.25
        %v346 = vmul.f32 %v345, 0.5
        %v347 = vsel %vm342, %v344, %v346
        %v350 = vcombine.low %v338, %v339
        %v352 = vmul.f32 %v347, %v350
        %v353 = vld [vmem:[#allocation2] sm:$0x3]
        %v355 = vcombine.high %v352, %v352
        %v357 = vsel %vm285, %v352, 0.0
        %v358 = vrot.slane %v357, 4
        %v359 = vadd.f32 %v357, %v358
        %v360 = vrot.slane %v359, 2
        %v361 = vadd.f32 %v359, %v360
        %v362 = vrot.slane %v361, 1
        %v363 = vadd.f32 %v361, %v362
        %v364 = vsel %vm285, %v355, 0.0
        %v365 = vrot.slane %v364, 4
        %v366 = vadd.f32 %v364, %v365
        %v367 = vrot.slane %v366, 2
        %v368 = vadd.f32 %v366, %v367
        %v369 = vrot.slane %v368, 1
        %v370 = vadd.f32 %v368, %v369
        %v373 = vcombine.low %v363, %v370
        %v375 = vunpack.c.l.s4 1966171168
        %v376 = vunpack.c.0.s8 %v375
        %v377 = vlaneseq
        %v378 = vshrl.u32 %v377, 7
        %v379 = vsub.s32 %v376, %v378
        %v380 = vrot.slane %v373, %v379
        %v382 = vunpack.c.l.s4 1966171168
        %v383 = vunpack.c.0.s8 %v382
        %v384 = vlaneseq
        %v385 = vshrl.u32 %v384, 7
        %v386 = vsub.s32 %v383, %v385
        %v387 = vrot.slane %v380, %v386
        %v389 = vadd.f32 %v353, %v387
        %v390 = vlaneseq
        %vm391 = vcmp.ge.s32.totalorder %v390, 0
        %vm392 = vcmp.lt.s32.totalorder %v390, 256
        %vm393 = vmand %vm391, %vm392
        %394 = vst.msk [vmem:[#allocation2] sm:$0x3] %vm393, %v389
        %p395 = scmp.eq.s32.totalorder %s29, 1
        // Predicated region
        $region49: #{tpu_custom_call.1} parent=31 // pred_check
          %p396 = pneg %p395
        $region50: #{tpu_custom_call.1} parent=31 // pred_check_branch
          %398 = sbr.rel (%p396) target = $region52
        $region51: #{tpu_custom_call.1} parent=31 // pred_region
          %v399 = vld [vmem:[#allocation2] sm:$0x3]
          %400 = vst.msk [vmem:[%s260] sm:$0x3] %vm393, %v399
        $region52: #{tpu_custom_call.1} parent=31 // pred_fallthru
          _
        %s401 = sand.u32 %s125, 1
        %s402 = scalar_lea.sflag [#allocation5], %s401
        %s403 = sand.u32 %s125, 1
        %s404 = smul.addr %s403, 2
        %s405 = scalar_lea.vmem [#allocation10], %s404
        // Predicated region
        $region53: #{tpu_custom_call.1} parent=31 // pred_check
          %p406 = pneg %p135
        $region54: #{tpu_custom_call.1} parent=31 // pred_check_branch
          %408 = sbr.rel (%p406) target = $region56
        $region55: #{tpu_custom_call.1} parent=31 // pred_region
          %s409 = smul.u32 2, %s28
          %s411 = ssub.s32 32, 32
          %412 = vsyncadd %s402, %s411
          %s413 = smul.addr %s409, 16
          %s414 = scalar_lea.hbm %s3, %s413
          %s416 = sshll.u32 %s405, 4
          %s417 = int_to_ptr.vmem [resolvable:$true] %s416
          %419 = dma.vmem_to_hbm [thread:$0]  %s417, 32, %s414, %s402
        $region56: #{tpu_custom_call.1} parent=31 // pred_fallthru
          _
      $region32: #{tpu_custom_call.1} parent=5 // pred_fallthru
        _
      %p420 = scmp.le.s32.totalorder 2, %s19
      // Predicated region
      $region57: #{tpu_custom_call.1} parent=5 // pred_check
        %p421 = pneg %p420
      $region58: #{tpu_custom_call.1} parent=5 // pred_check_branch
        %423 = sbr.rel (%p421) target = $region60
      $region59: #{tpu_custom_call.1} parent=5 // pred_region
        %s424 = ssub.s32 %s19, 2
        // Predicated region
        $region61: #{tpu_custom_call.1} parent=59 // pred_check
          %p425 = pneg %p141
        $region62: #{tpu_custom_call.1} parent=59 // pred_check_branch
          %427 = sbr.rel (%p425) target = $region64
        $region63: #{tpu_custom_call.1} parent=59 // pred_region
          %s428 = sand.u32 %s126, 1
          %s429 = scalar_lea.sflag [#allocation5], %s428
          %s430 = sand.u32 %s126, 1
          %s431 = smul.addr %s430, 2
          %s432 = scalar_lea.vmem [#allocation10], %s431
          %433 = dma.done %s429, 32
        $region64: #{tpu_custom_call.1} parent=59 // pred_fallthru
          _
      $region60: #{tpu_custom_call.1} parent=5 // pred_fallthru
        _
    $region6: #{tpu_custom_call.1} parent=1 // loop_footer
      %s23 = sadd.s32 1, %s19
    $region7: #{tpu_custom_call.1} parent=1 // loop_footer_branch
      %18 = sbr.rel target = $region3
    $region8: #{tpu_custom_call.1} parent=1 // loop_exit
      _
    %434 = vsyncpa [#allocation4], 1
    %s435 = scalar_lea.sflag [#allocation4], 1
    %436 = vsyncpa %s435, 1
    %437 = vsyncpa [#allocation9], 1
    %s438 = scalar_lea.sflag [#allocation9], 1
    %439 = vsyncpa %s438, 1
    %440 = vsyncpa [#allocation5], 1
    %s441 = scalar_lea.sflag [#allocation5], 1
    %442 = vsyncpa %s441, 1
    %443 = vsyncpa [#allocation6], 1
    %s444 = scalar_lea.sflag [#allocation6], 1
    %445 = vsyncpa %s444, 1

</llo_original>
